<compile_context>
chip_gen: v6e
topology: v6e:2x2x1
jax: 0.10.0
libtpu: 0.0.40
codegen_flags: <defaults>
</compile_context>

<pallas_src>
import math
import numpy as np
import jax
import jax.numpy as jnp
from jax import lax
from jax.experimental import pallas as pl
from jax.experimental.pallas import tpu as pltpu

_SENTINEL = -(2 ** 30)   # "no table assigned / padding" -> never matches a row


def _round_up(x: int, m: int) -> int:
    return ((x + m - 1) // m) * m


# ----------------------------- Slicer (exact numpy replica) -----------------
def compute_slice(block_mask, max_blocks: int, offset_steps: int,
                  num_steps: int, prev_steps: int) -> np.ndarray:
    block_mask = np.asarray(block_mask, dtype=bool)
    block_size = block_mask.shape[0]
    num_kept = int(block_mask.sum())
    kept = np.where(block_mask)[0]
    kept_rep = np.tile(kept, max_blocks)
    offsets = np.repeat(np.arange(max_blocks), num_kept)
    indices = kept_rep + block_size * offsets
    prev_steps = prev_steps - offset_steps
    total_steps = num_steps + prev_steps
    num_blocks = math.ceil(total_steps / block_size)
    indices = indices[: num_blocks * num_kept]
    sel = indices[np.logical_and(prev_steps <= indices, indices < total_steps)]
    return (sel - prev_steps).astype(np.int64)


# ----------------------------- Pallas kernel --------------------------------
def _embed_kernel(tok_ref, tab_ref, out_ref):
    # tok_ref: [TILE_N, 1] int32  global row index into padded table (<0 => 0s)
    # tab_ref: [TILE_V, Dp]       chunk j of the combined embedding table
    # out_ref: [TILE_N, Dp] f32   output rows; VMEM-resident across V chunks
    j = pl.program_id(1)

    @pl.when(j == 0)
    def _init():
        out_ref[...] = jnp.zeros_like(out_ref)

    tile_n = tok_ref.shape[0]
    tile_v = tab_ref.shape[0]
    tok = tok_ref[...]                                            # [TILE_N, 1]
    tab = tab_ref[...]                                            # [TILE_V, Dp]
    v_ids = j * tile_v + lax.broadcasted_iota(jnp.int32, (tile_n, tile_v), 1)
    # 0/1 one-hot in the table's dtype (bf16 tables -> bf16 MXU inputs, exact).
    one_hot = (tok == v_ids).astype(tab.dtype)                    # [TILE_N, TILE_V]
    out_ref[...] += jnp.dot(one_hot, tab,
                            preferred_element_type=jnp.float32)   # [TILE_N, Dp]


# ----------------------------- Embedder wrapper ------------------------------
def embedder_forward(tokens, tables, block_masks, max_blocks, offset_steps,
                     num_steps, prev_steps, *, max_tile_n=256, max_tile_v=512):
    """tokens: [B, T] int; tables: dict name -> [vocab, D] jnp array."""
    B, T = tokens.shape
    assert T == num_steps
    names = list(tables.keys())
    D = int(tables[names[0]].shape[1])
    tab_dtype = tables[names[0]].dtype

    # Combined table + per-table row offsets.
    row_off, off = {}, 0
    for n in names:
        row_off[n] = off
        off += int(tables[n].shape[0])
    V_total = off

    # Padded sizes: lane-dense D, sublane-aligned / chunkable V, row tiles.
    Dp = _round_up(D, 128)
    tile_v = max_tile_v if V_total > max_tile_v else _round_up(V_total, 8)
    Vp = _round_up(V_total, tile_v)

    combined = jnp.concatenate([tables[n] for n in names], axis=0)
    combined = jnp.pad(combined, ((0, Vp - V_total), (0, Dp - D)))  # [Vp, Dp]

    # Per-time-position row offset (sentinel -> no one-hot hit -> zeros,
    # matching the torch.zeros init for unassigned positions).
    pos_off = np.full((T,), _SENTINEL, dtype=np.int32)
    for n in names:
        s = compute_slice(block_masks[n], max_blocks, offset_steps,
                          num_steps, prev_steps)
        pos_off[s] = row_off[n]

    N = B * T
    tile_n = min(max_tile_n, _round_up(N, 8))
    Np = _round_up(N, tile_n)
    tok_adj = tokens.astype(jnp.int32) + jnp.asarray(pos_off)[None, :]  # [B, T]
    tok_col = jnp.pad(tok_adj.reshape(N, 1), ((0, Np - N), (0, 0)),
                      constant_values=_SENTINEL)                        # [Np, 1]

    grid = (Np // tile_n, Vp // tile_v)   # reduction (V) axis last

    # Scoped-VMEM budget: actual blocks (double-buffered) + the one-hot and dot
    # intermediates, with 2x headroom, clamped for v7x's 64 MiB VMEM.
    itemsize = jnp.dtype(tab_dtype).itemsize
    est = (2 * tile_n * 128 * 4            # (TILE_N, 1) token blocks (lane-padded)
           + 2 * tile_v * Dp * itemsize    # table chunk (double-buffered)
           + 2 * tile_n * Dp * 4           # f32 output block (double-buffered)
           + tile_n * tile_v * 4           # one-hot intermediate (worst case f32)
           + tile_n * Dp * 4)              # dot result before accumulation
    vmem_limit = int(min(max(2 * est, 32 * 2 ** 20), 48 * 2 ** 20))

    out_flat = pl.pallas_call(
        _embed_kernel,
        out_shape=jax.ShapeDtypeStruct((Np, Dp), jnp.float32),
        grid=grid,
        in_specs=[
            pl.BlockSpec((tile_n, 1), lambda i, j: (i, 0)),     # token rows
            pl.BlockSpec((tile_v, Dp), lambda i, j: (j, 0)),    # table V chunk
        ],
        out_specs=pl.BlockSpec((tile_n, Dp), lambda i, j: (i, 0)),
        compiler_params=pltpu.CompilerParams(
            dimension_semantics=("parallel", "arbitrary"),
            vmem_limit_bytes=vmem_limit),
    )(tok_col, combined)

    return out_flat[:N, :D].reshape(B, T, D)


# ----------------------------- Demo / check ----------------------------------
def _demo_config(key, *, B, T, D, max_blocks, offset_steps, prev_steps,
                 block_masks, vocab_sizes, table_dtype):
    names = list(block_masks.keys())
    keys = jax.random.split(key, len(names) + 1)
    tables = {}
    for i, n in enumerate(names):
        w = jax.random.normal(keys[i], (vocab_sizes[n], D), jnp.float32)
        tables[n] = w.astype(table_dtype)
    num_steps = T

    # Per-position table assignment (to generate in-range tokens).
    assign = np.full((T,), -1, dtype=np.int64)
    for ti, n in enumerate(names):
        s = compute_slice(block_masks[n], max_blocks, offset_steps,
                          num_steps, prev_steps)
        assign[s] = ti
    assert (assign >= 0).all()
    max_vocab = np.array([vocab_sizes[names[int(a)]] for a in assign],
                         dtype=np.int32)
    u = jax.random.uniform(keys[-1], (B, T))
    tokens = (u * jnp.asarray(max_vocab)[None, :]).astype(jnp.int32)
    tokens = jnp.clip(tokens, 0, jnp.asarray(max_vocab)[None, :] - 1)

    out = embedder_forward(tokens, tables, block_masks, max_blocks,
                           offset_steps, num_steps, prev_steps)
    out = jax.block_until_ready(out)

    # Pure-JAX reference (same semantics as the PyTorch forward).
    ref = jnp.zeros((B, T, D), jnp.float32)
    for n in names:
        s = compute_slice(block_masks[n], max_blocks, offset_steps,
                          num_steps, prev_steps)
        ref = ref.at[:, s].set(tables[n][tokens[:, s]].astype(jnp.float32))

    assert out.shape == (B, T, D) and out.dtype == jnp.float32
    np.testing.assert_allclose(np.asarray(out), np.asarray(ref),
                               rtol=1e-6, atol=1e-6)


if __name__ == "__main__":
    key = jax.random.PRNGKey(0)
    k1, k2 = jax.random.split(key)

    # Config 1: small, f32 tables (exact nn.Embedding semantics); single
    # V chunk, single (small) N tile.  Block of 4 tokens: 3 "obs" + 1 "act".
    _demo_config(
        k1, B=2, T=8, D=32, max_blocks=4, offset_steps=0, prev_steps=4,
        block_masks={"obs": np.array([1, 1, 1, 0], dtype=bool),
                     "act": np.array([0, 0, 0, 1], dtype=bool)},
        vocab_sizes={"obs": 16, "act": 4},
        table_dtype=jnp.float32)

    # Config 2: larger vocab (two 512-row V chunks streamed through VMEM with
    # the resident output block as accumulator), two 256-row N tiles, padded D,
    # bf16 tables (bf16 one-hot on the MXU, f32 accumulation -> still exact).
    _demo_config(
        k2, B=16, T=20, D=96, max_blocks=8, offset_steps=0, prev_steps=6,
        block_masks={"obs": np.array([1, 1, 1, 0], dtype=bool),
                     "act": np.array([0, 0, 0, 1], dtype=bool)},
        vocab_sizes={"obs": 600, "act": 70},
        table_dtype=jnp.bfloat16)

    print("KERNEL_OK")
</pallas_src>

<mosaic_0001>
module attributes {stable_mosaic.version = 11 : i64} {
  func.func @_embed_kernel(%arg0: i32, %arg1: i32, %arg2: memref<16x1xi32, #tpu.memory_space<vmem>>, %arg3: memref<24x128xf32, #tpu.memory_space<vmem>>, %arg4: memref<16x128xf32, #tpu.memory_space<vmem>>) attributes {dimension_semantics = [#tpu.dimension_semantics<parallel>, #tpu.dimension_semantics<arbitrary>], iteration_bounds = array<i64: 1, 1>, scalar_prefetch = 0 : i64, scratch_operands = 0 : i64, tpu.core_type = #tpu.core_type<tc>, window_params = [{transform_indices = @transform_0, window_bounds = array<i64: 16, 1>}, {transform_indices = @transform_1, window_bounds = array<i64: 24, 128>}, {transform_indices = @transform_2, window_bounds = array<i64: 16, 128>}]} {
    %c0_i32 = arith.constant 0 : i32
    %0 = arith.cmpi eq, %arg1, %c0_i32 : i32
    %1 = arith.extui %0 : i1 to i32
    %c0_i32_0 = arith.constant 0 : i32
    %2 = arith.cmpi ne, %1, %c0_i32_0 : i32
    scf.if %2 {
      %cst_8 = arith.constant 0.000000e+00 : f32
      %17 = vector.broadcast %cst_8 : f32 to vector<16x128xf32>
      %c0_9 = arith.constant 0 : index
      %c0_10 = arith.constant 0 : index
      %18 = vector.load %arg4[%c0_9, %c0_10] : memref<16x128xf32, #tpu.memory_space<vmem>>, vector<16x128xf32>
      tpu.vector_store %arg4[%c0_9, %c0_10], %17 {strides = array<i32>} : memref<16x128xf32, #tpu.memory_space<vmem>>, vector<16x128xf32>,
    } else {
    }
    %c0 = arith.constant 0 : index
    %c0_1 = arith.constant 0 : index
    %3 = vector.load %arg2[%c0, %c0_1] : memref<16x1xi32, #tpu.memory_space<vmem>>, vector<16x1xi32>
    %c0_2 = arith.constant 0 : index
    %c0_3 = arith.constant 0 : index
    %4 = vector.load %arg3[%c0_2, %c0_3] : memref<24x128xf32, #tpu.memory_space<vmem>>, vector<24x128xf32>
    %c24_i32 = arith.constant 24 : i32
    %5 = arith.muli %arg1, %c24_i32 : i32
    %6 = tpu.iota {dimensions = array<i32: 1>} : vector<16x24xi32>
    %7 = vector.broadcast %5 : i32 to vector<16x24xi32>
    %8 = arith.addi %7, %6 : vector<16x24xi32>
    %9 = vector.broadcast %3 : vector<16x1xi32> to vector<16x24xi32>
    %10 = arith.cmpi eq, %9, %8 : vector<16x24xi32>
    %11 = arith.extui %10 : vector<16x24xi1> to vector<16x24xi32>
    %12 = arith.sitofp %11 : vector<16x24xi32> to vector<16x24xf32>
    %c0_4 = arith.constant 0 : index
    %c0_5 = arith.constant 0 : index
    %13 = vector.load %arg4[%c0_4, %c0_5] : memref<16x128xf32, #tpu.memory_space<vmem>>, vector<16x128xf32>
    %cst = arith.constant dense<0.000000e+00> : vector<16x128xf32>
    %14 = tpu.matmul %12, %4, %cst {dimension_numbers = #tpu.dot_dimension_numbers<[1], [0], [0], [1], [0, 0, 1, 1], [], []>} : vector<16x24xf32>, vector<24x128xf32>, vector<16x128xf32> -> vector<16x128xf32>
    %15 = arith.addf %13, %14 : vector<16x128xf32>
    %c0_6 = arith.constant 0 : index
    %c0_7 = arith.constant 0 : index
    %16 = vector.load %arg4[%c0_6, %c0_7] : memref<16x128xf32, #tpu.memory_space<vmem>>, vector<16x128xf32>
    tpu.vector_store %arg4[%c0_6, %c0_7], %15 {strides = array<i32>} : memref<16x128xf32, #tpu.memory_space<vmem>>, vector<16x128xf32>,
    return
  }
  func.func @transform_0(%arg0: i32, %arg1: i32) -> (i32, i32) {
    %c0_i32 = arith.constant 0 : i32
    %c0_i32_0 = arith.constant 0 : i32
    return %arg0, %c0_i32 : i32, i32
  }
  func.func @transform_1(%arg0: i32, %arg1: i32) -> (i32, i32) {
    %c0_i32 = arith.constant 0 : i32
    %c0_i32_0 = arith.constant 0 : i32
    return %arg1, %c0_i32 : i32, i32
  }
  func.func @transform_2(%arg0: i32, %arg1: i32) -> (i32, i32) {
    %c0_i32 = arith.constant 0 : i32
    %c0_i32_0 = arith.constant 0 : i32
    return %arg0, %c0_i32 : i32, i32
  }
}

</mosaic_0001>

<llo_original>
// kernel: tpu_custom_call.1
$region0: #{tpu_custom_call.1}
  #allocation0 [shape = 'u32[]', space=smem, size = 0x4, offset = 0x4, fixed_abs, tag = 'smem constant byte address 0x4 - core index']
  #allocation1 [shape = 'u32[144,128]{1,0:T(1,128)}', space=vmem, size = 0x12000, scoped, tag = 'internal scratch']
  %s0 = inlined_call_operand.vmem [shape: s32[16,1], index: 0, kind: input, shape index: {}]
  %s1 = inlined_call_operand.hbm [shape: f32[24,128], index: 1, kind: input, shape index: {}]
  %s2 = inlined_call_operand.hbm [shape: f32[16,128], index: 2, kind: output, shape index: {}]
  %s3 = sld [smem:[#allocation0]]
  $region26: #{tpu_custom_call.1} parent=0
    _
  %s5 = ssub.s32 1, %s3
  %s6 = scalar_select 0, %s5, %s3
  $region1: #{tpu_custom_call.1} parent=0
    #allocation2 [shape = 'u8[12288]{0}', space=vmem, size = 0x3000, scoped, tag = 'input window, operand 1, single buffered']
    #allocation3 [shape = 's32[1]{0}', space=sflag, size = 0x4, scoped, tag = 'scoped memory for tpu_custom_call.1']
    #allocation4 [shape = 's32[1]{0}', space=sflag, size = 0x4, scoped, tag = 'scoped memory for tpu_custom_call.1']
    #allocation5 [shape = 'u8[8192]{0}', space=vmem, size = 0x2000, scoped, tag = 'output window, operand 0, single buffered']
    %7 = vsyncpa [#allocation3], 0
    %8 = vsyncpa [#allocation4], 0
    // Predicated region
    $region2: #{tpu_custom_call.1} parent=1 // pred_check
      _
    $region3: #{tpu_custom_call.1} parent=1 // pred_check_branch
      %10 = sbr.rel (0) target = $region5
    $region4: #{tpu_custom_call.1} parent=1 // pred_region
      _
    $region5: #{tpu_custom_call.1} parent=1 // pred_fallthru
      _
    // Predicated region
    $region6: #{tpu_custom_call.1} parent=1 // pred_check
      _
    $region7: #{tpu_custom_call.1} parent=1 // pred_check_branch
      %12 = sbr.rel (0) target = $region9
    $region8: #{tpu_custom_call.1} parent=1 // pred_region
      %s14 = ssub.s32 384, 384
      %15 = vsyncadd [#allocation3], %s14
      %s16 = sshll.u32 [#allocation2], 4
      %s17 = int_to_ptr.vmem [resolvable:$true] %s16
      %22 = dma.hbm_to_vmem [thread:$0]  %s1, 384, %s17, [#allocation3], 128, 128, 8
    $region9: #{tpu_custom_call.1} parent=1 // pred_fallthru
      _
    // Predicated region
    $region10: #{tpu_custom_call.1} parent=1 // pred_check
      _
    $region11: #{tpu_custom_call.1} parent=1 // pred_check_branch
      %24 = sbr.rel (0) target = $region13
    $region12: #{tpu_custom_call.1} parent=1 // pred_region
      %25 = dma.done [#allocation3], 384
    $region13: #{tpu_custom_call.1} parent=1 // pred_fallthru
      _
    %p26 = scmp.eq.s32.totalorder 0, 0
    // Predicated region
    $region14: #{tpu_custom_call.1} parent=1 // pred_check
      %p27 = pneg %p26
    $region15: #{tpu_custom_call.1} parent=1 // pred_check_branch
      %29 = sbr.rel (%p27) target = $region17
    $region16: #{tpu_custom_call.1} parent=1 // pred_region
      %30 = vst [vmem:[#allocation5] sm:$0xff] 0.0
      %31 = vst [vmem:[#allocation5 + $0x8] sm:$0xff] 0.0
    $region17: #{tpu_custom_call.1} parent=1 // pred_fallthru
      _
    %v32 = vld [vmem:[%s0] sm:$0xff]
    %v33 = vld [vmem:[%s0 + $0x8] sm:$0xff]
    %v34 = vld [vmem:[#allocation2] sm:$0xff]
    %v35 = vld [vmem:[#allocation2 + $0x8] sm:$0xff]
    %v36 = vld [vmem:[#allocation2 + $0x10] sm:$0xff]
    %s37 = smul.u32 0, 24
    %v38 = vlaneseq
    %v39 = vand.u32 %v38, 127
    %v40 = vstv %s37
    %v41 = vadd.s32 %v40, %v39
    %42 = vset.pattern.permute.xlu0 0
    %43 = vperm.xlu0 %42, %v32
    %v44 = vpop.permute.xlu0 %43
    %45 = vset.pattern.permute.xlu0 0
    %46 = vperm.xlu0 %45, %v33
    %v47 = vpop.permute.xlu0 %46
    %vm48 = vcmp.eq.s32.totalorder %v44, %v41
    %vm49 = vcmp.eq.s32.totalorder %v47, %v41
    %v50 = vsel %vm48, 1, 0
    %v51 = vsel %vm49, 1, 0
    %v52 = vcvt.s32.f32 %v50
    %v53 = vcvt.s32.f32 %v51
    %v54 = vld [vmem:[#allocation5] sm:$0xff]
    %v55 = vld [vmem:[#allocation5 + $0x8] sm:$0xff]
    %vm56 = vcmask 195584
    %v58 = vsel %vm56, %v52, 0
    %v61 = vsel %vm56, %v53, 0
    %63 = vmatprep.subr.mxu0 0.0
    %64 = vmatpush1.msra.mxu0 0.0
    %65 = vmatprep.subr.mxu0 0.0
    %66 = vmatpush1.msra.mxu0 0.0
    %67 = vmatprep.subr.mxu0 0.0
    %68 = vmatpush1.msra.mxu0 0.0
    %69 = vmatprep.subr.mxu0 0.0
    %70 = vmatpush1.msra.mxu0 0.0
    %71 = vmatprep.subr.mxu0 0.0
    %72 = vmatpush1.msra.mxu0 0.0
    %73 = vmatprep.subr.mxu0 0.0
    %74 = vmatpush1.msra.mxu0 0.0
    %75 = vmatprep.subr.mxu0 0.0
    %76 = vmatpush1.msra.mxu0 0.0
    %77 = vmatprep.subr.mxu0 0.0
    %78 = vmatpush1.msra.mxu0 0.0
    %79 = vmatprep.subr.mxu0 0.0
    %80 = vmatpush1.msra.mxu0 0.0
    %81 = vmatprep.subr.mxu0 0.0
    %82 = vmatpush1.msra.mxu0 0.0
    %83 = vmatprep.subr.mxu0 0.0
    %84 = vmatpush1.msra.mxu0 0.0
    %85 = vmatprep.subr.mxu0 0.0
    %86 = vmatpush1.msra.mxu0 0.0
    %87 = vmatprep.subr.mxu0 0.0
    %88 = vmatpush1.msra.mxu0 0.0
    %89 = vmatprep.subr.mxu0 0.0
    %90 = vmatpush1.msra.mxu0 %v36
    %91 = vmatprep.subr.mxu0 0.0
    %92 = vmatpush1.msra.mxu0 %v35
    %93 = vmatprep.subr.mxu0 0.0
    %94 = vmatpush1.msra.mxu0 %v34
    %95 = vmatprep.subr.mxu0 0.0
    %96 = vmatpush2.msra.mxu0 0.0
    %97 = vmatprep.subr.mxu0 0.0
    %98 = vmatpush2.msra.mxu0 0.0
    %99 = vmatprep.subr.mxu0 0.0
    %100 = vmatpush2.msra.mxu0 0.0
    %101 = vmatprep.subr.mxu0 0.0
    %102 = vmatpush2.msra.mxu0 0.0
    %103 = vmatprep.subr.mxu0 0.0
    %104 = vmatpush2.msra.mxu0 0.0
    %105 = vmatprep.subr.mxu0 0.0
    %106 = vmatpush2.msra.mxu0 0.0
    %107 = vmatprep.subr.mxu0 0.0
    %108 = vmatpush2.msra.mxu0 0.0
    %109 = vmatprep.subr.mxu0 0.0
    %110 = vmatpush2.msra.mxu0 0.0
    %111 = vmatprep.subr.mxu0 0.0
    %112 = vmatpush2.msra.mxu0 0.0
    %113 = vmatprep.subr.mxu0 0.0
    %114 = vmatpush2.msra.mxu0 0.0
    %115 = vmatprep.subr.mxu0 0.0
    %116 = vmatpush2.msra.mxu0 0.0
    %117 = vmatprep.subr.mxu0 0.0
    %118 = vmatpush2.msra.mxu0 0.0
    %119 = vmatprep.subr.mxu0 0.0
    %120 = vmatpush2.msra.mxu0 0.0
    %121 = vmatprep.subr.mxu0 0.0
    %122 = vmatpush2.msra.mxu0 0.0
    %123 = vmatprep.subr.mxu0 0.0
    %124 = vmatpush2.msra.mxu0 0.0
    %125 = vmatprep.subr.mxu0 0.0
    %126 = vmatpush2.msra.mxu0 0.0
    %127 = vmatprep.mubr.f32.mxu0 0.0
    %128 = vmatmul.mubr.f32.gmra.mxu0 %v58
    %v129 = vpop.f32.mrf.mxu0
    %v130 = vadd.f32 0.0, %v129
    %v131 = vpop.f32.mrf.mxu0
    %132 = vmatprep.mubr.f32.mxu0 0.0
    %133 = vmatmul.mubr.f32.gmra.mxu0 %v61
    %v134 = vpop.f32.mrf.mxu0
    %v135 = vadd.f32 0.0, %v134
    %v136 = vpop.f32.mrf.mxu0
    %137 = vdwg.mxu0
    %v138 = vadd.f32 %v54, %v130
    %v139 = vadd.f32 %v55, %v135
    %140 = vst [vmem:[#allocation5] sm:$0xff] %v138
    %141 = vst [vmem:[#allocation5 + $0x8] sm:$0xff] %v139
    // Predicated region
    $region18: #{tpu_custom_call.1} parent=1 // pred_check
      _
    $region19: #{tpu_custom_call.1} parent=1 // pred_check_branch
      %143 = sbr.rel (0) target = $region21
    $region20: #{tpu_custom_call.1} parent=1 // pred_region
      %s145 = ssub.s32 256, 256
      %146 = vsyncadd [#allocation4], %s145
      %s147 = sshll.u32 [#allocation5], 4
      %s148 = int_to_ptr.vmem [resolvable:$true] %s147
      %153 = dma.vmem_to_hbm [thread:$0]  %s148, 256, %s2, [#allocation4], 128, 128, 8
    $region21: #{tpu_custom_call.1} parent=1 // pred_fallthru
      _
    // Predicated region
    $region22: #{tpu_custom_call.1} parent=1 // pred_check
      _
    $region23: #{tpu_custom_call.1} parent=1 // pred_check_branch
      %155 = sbr.rel (0) target = $region25
    $region24: #{tpu_custom_call.1} parent=1 // pred_region
      %156 = dma.done [#allocation4], 256
    $region25: #{tpu_custom_call.1} parent=1 // pred_fallthru
      _
    %157 = vsyncpa [#allocation3], 1
    %158 = vsyncpa [#allocation4], 1

</llo_original>
